<compile_context>
chip_gen: v5e
topology: v5e:2x2
jax: 0.10.0
libtpu: 0.0.40
codegen_flags: <defaults>
</compile_context>

<pallas_src>
import jax
import jax.numpy as jnp
from jax import lax
from jax.experimental import pallas as pl
from jax.experimental.pallas import tpu as pltpu

SUBLANE = 16          # channel padding granule (bf16 sublane packing)
LANE = 128            # lane granule
LANE_TARGET = 2048    # target lane width per grid step (amortize step overhead)


def _round_up(v, m):
    return ((v + m - 1) // m) * m


# --------------------------------------------------------------------------- #
# pltpu.roll direction probe (one tiny kernel, run once, cached)
# --------------------------------------------------------------------------- #
_ROLL_SIGN = None  # sign s such that pltpu.roll(x, (s*off) % L)[i] == x[i + off]


def _roll_sign():
    """Detect pltpu.roll's sign convention once with an 8x128 probe kernel.

    We need shifted[i] = x[i + off]; under jnp.roll semantics that is
    shift = -off, under the opposite convention shift = +off.
    TODO(synk): probe is fragile on exotic/interpret backends (review note);
    acceptable here -- it either resolves correctly or raises loudly.
    """
    global _ROLL_SIGN
    if _ROLL_SIGN is not None:
        return _ROLL_SIGN

    def probe(x_ref, o_ref):
        o_ref[...] = pltpu.roll(x_ref[...], 1, axis=1)

    x = lax.broadcasted_iota(jnp.float32, (8, 128), 1)
    y = pl.pallas_call(
        probe,
        out_shape=jax.ShapeDtypeStruct((8, 128), jnp.float32),
        in_specs=[pl.BlockSpec(memory_space=pltpu.MemorySpace.VMEM)],
        out_specs=pl.BlockSpec(memory_space=pltpu.MemorySpace.VMEM),
    )(x)
    y00 = float(jax.device_get(y)[0, 0])
    if y00 == 127.0:      # jnp.roll convention: out[i] = in[i - shift]
        _ROLL_SIGN = -1
    elif y00 == 1.0:      # opposite convention: out[i] = in[i + shift]
        _ROLL_SIGN = 1
    else:
        raise RuntimeError(f"unexpected pltpu.roll behaviour (probe={y00})")
    return _ROLL_SIGN


def _vmem_limit_bytes():
    """Generation-aware scoped-VMEM limit (review: don't cap v5e/v6e at 32 MiB)."""
    try:
        cap = int(pltpu.get_tpu_info().vmem_capacity_bytes)
        return int(min(96 * 1024 * 1024, (cap * 3) // 4))
    except Exception:
        return 48 * 1024 * 1024


# --------------------------------------------------------------------------- #
# Fused multi_conv block kernel (im2col fold, one MXU matmul per layer)
# --------------------------------------------------------------------------- #
def _make_block_kernel(num_layers, Hp, Wp, mp_pad, lanes, roll_sign):
    """Chain of `num_layers` 3x3 'same' convolutions on Nb lane-concatenated
    samples held entirely in VMEM as a (C_pad, lanes) bf16 padded-flat tile
    (sublanes = channels, lanes = per-sample zero-padded flattened spatial)."""
    H, W = Hp - 2, Wp - 2

    def kernel(x_ref, *refs):
        o_ref = refs[-1]
        wb = refs[:-1]

        # Interior mask, per sample (modulo mp_pad): lane is a real pixel iff
        # 1 <= hp <= H and 1 <= wp <= W.  Also kills the 128-alignment tail.
        g = lax.broadcasted_iota(jnp.int32, (1, lanes), 1)
        f = g % mp_pad
        hp = f // Wp
        wp = f % Wp
        interior = (hp >= 1) & (hp <= H) & (wp >= 1) & (wp <= W)

        cur = x_ref[...]                                 # (Cin_pad, lanes) bf16
        for layer in range(num_layers):
            w_ref = wb[2 * layer]                        # (Cout_pad, 9*Cin_pad) bf16
            b_ref = wb[2 * layer + 1]                    # (Cout_pad, 1)         f32

            # im2col along K: 9 lane-rolled copies stacked on sublanes.  All
            # interior-pixel reads stay inside their own sample's mp_pad
            # window; wrapped/cross-sample lanes land only on masked positions.
            taps = []
            for t in range(9):
                dy, dx = t // 3, t % 3
                off = (dy - 1) * Wp + (dx - 1)
                taps.append(cur if off == 0 else
                            pltpu.roll(cur, (roll_sign * off) % lanes, axis=1))
            stacked = jnp.concatenate(taps, axis=0)      # (9*Cin_pad, lanes) bf16

            # One wide-K MXU matmul per layer, f32 accumulation.
            acc = jnp.dot(w_ref[...], stacked,
                          preferred_element_type=jnp.float32)

            # Bias on interior pixels only; re-zero padding ring + tail so the
            # next fused layer sees a correct zero "same" padding border.
            cur = jnp.where(interior, acc + b_ref[...], 0.0).astype(jnp.bfloat16)

        o_ref[...] = cur                                 # lane-dense bf16 store

    return kernel


def _pack_layer(w, b):
    """(3,3,Cin,Cout) HWIO + (Cout,) -> (Cout_pad, 9*Cin_pad) bf16, (Cout_pad,1) f32.

    K is ordered tap-major / channel-minor to match the kernel's tap stacking.
    Phantom (padded) channels get zero weights and zero bias.
    """
    _, _, cin, cout = w.shape
    cinp, coutp = _round_up(cin, SUBLANE), _round_up(cout, SUBLANE)
    wt = w.reshape(9, cin, cout)
    wt = jnp.pad(wt, ((0, 0), (0, cinp - cin), (0, coutp - cout)))
    wt = jnp.transpose(wt, (2, 0, 1)).reshape(coutp, 9 * cinp).astype(jnp.bfloat16)
    bt = jnp.pad(b, (0, coutp - cout)).reshape(coutp, 1).astype(jnp.float32)
    return wt, bt


def _choose_nb(n, mp_pad):
    """Samples per grid step: lane-concatenate until ~LANE_TARGET lanes/step."""
    want = max(1, min(n, LANE_TARGET // mp_pad))
    for nb in range(want, 0, -1):
        if n % nb == 0:
            return nb
    return 1


def conv_block_flat(xf, layers, n, h, w):
    """multi_conv block on the padded-flat layout.

    xf: (Cin_pad, n*mp_pad) bf16; per-sample zero-padded flattened (h+2,w+2)
        grid on lanes (ring + alignment tail are zero), channels on sublanes.
    layers: list of (w:(3,3,Cin,Cout), b:(Cout,)).
    Returns (Cout_pad_last, n*mp_pad) bf16 in the same layout.
    """
    hp, wp = h + 2, w + 2
    mp = hp * wp
    mp_pad = _round_up(mp, LANE)
    cin_pad = _round_up(layers[0][0].shape[2], SUBLANE)
    assert xf.shape == (cin_pad, n * mp_pad)

    nb = _choose_nb(n, mp_pad)
    lanes = nb * mp_pad
    grid = (n // nb,)

    args = [xf]
    in_specs = [pl.BlockSpec((cin_pad, lanes), lambda i: (0, i))]
    for wl, bl in layers:
        wt, bt = _pack_layer(wl, bl)
        args += [wt, bt]
        in_specs += [pl.BlockSpec(wt.shape, lambda i: (0, 0)),
                     pl.BlockSpec(bt.shape, lambda i: (0, 0))]
    cout_pad = args[-2].shape[0]

    kernel = _make_block_kernel(len(layers), hp, wp, mp_pad, lanes, _roll_sign())

    # TODO(synk): for production H*W add a row-halo grid axis over H so each
    # per-step tile stays within v7x's 64 MiB VMEM and every TensorCore gets
    # >=2 pipelined steps even at small batch.
    return pl.pallas_call(
        kernel,
        out_shape=jax.ShapeDtypeStruct((cout_pad, n * mp_pad), jnp.bfloat16),
        grid_spec=pltpu.PrefetchScalarGridSpec(
            num_scalar_prefetch=0,
            grid=grid,
            in_specs=in_specs,
            out_specs=pl.BlockSpec((cout_pad, lanes), lambda i: (0, i)),
        ),
        compiler_params=pltpu.CompilerParams(
            dimension_semantics=("parallel",),   # batch blocks across TCs
            vmem_limit_bytes=_vmem_limit_bytes(),
        ),
    )(*args)


# --------------------------------------------------------------------------- #
# Padded-flat layout plumbing + MaxPool2d(2)  (fused XLA passes, no transposes
# on the main path; NCHW is produced only for the res / final API outputs)
# --------------------------------------------------------------------------- #
def _to_padded_flat(a):
    """(C_pad, N, h, w) -> (C_pad, N*mp_pad) bf16 padded-flat (zero ring + tail)."""
    cp, n, h, w = a.shape
    hp, wp = h + 2, w + 2
    mp = hp * wp
    mp_pad = _round_up(mp, LANE)
    ap = jnp.pad(a, ((0, 0), (0, 0), (1, 1), (1, 1))).reshape(cp, n, mp)
    ap = jnp.pad(ap, ((0, 0), (0, 0), (0, mp_pad - mp)))
    return ap.reshape(cp, n * mp_pad).astype(jnp.bfloat16)


def _flat_interior(yf, n, h, w):
    """(C_pad, N*mp_pad) padded-flat -> (C_pad, N, h, w) interior."""
    cp = yf.shape[0]
    hp, wp = h + 2, w + 2
    mp = hp * wp
    mp_pad = _round_up(mp, LANE)
    y = yf.reshape(cp, n, mp_pad)[:, :, :mp].reshape(cp, n, hp, wp)
    return y[:, :, 1:h + 1, 1:w + 1]


def _maxpool2x2(a):
    """nn.MaxPool2d(2) on a (C_pad, N, h, w) tensor with even h, w."""
    cp, n, h, w = a.shape
    return a.reshape(cp, n, h // 2, 2, w // 2, 2).max(axis=(3, 5))


# --------------------------------------------------------------------------- #
# Model forward (encoderGenerator)
# --------------------------------------------------------------------------- #
def encoder_generator_forward(x, params):
    """encoderGenerator.forward: NCHW f32 in -> (NCHW f32 out, [NCHW f32 res...])."""
    n, c, h, w = x.shape

    # NCHW -> padded-flat bf16 once (channels padded to the sublane granule).
    cin_pad = _round_up(c, SUBLANE)
    xc = jnp.pad(x.astype(jnp.float32), ((0, 0), (0, cin_pad - c), (0, 0), (0, 0)))
    xf = _to_padded_flat(jnp.transpose(xc, (1, 0, 2, 3)))

    res = []
    names = ("conv1", "conv2", "conv3")
    for bi, name in enumerate(names):
        layers = params[name]
        yf = conv_block_flat(xf, layers, n, h, w)
        c_true = layers[-1][0].shape[3]

        interior = _flat_interior(yf, n, h, w)           # (C_pad, N, h, w) bf16
        res.append(jnp.transpose(interior[:c_true], (1, 0, 2, 3)).astype(jnp.float32))

        pooled = _maxpool2x2(interior)                   # (C_pad, N, h/2, w/2)
        h, w = h // 2, w // 2
        if bi + 1 < len(names):
            xf = _to_padded_flat(pooled)                 # stay in padded-flat layout
        else:
            out = jnp.transpose(pooled[:c_true], (1, 0, 2, 3)).astype(jnp.float32)
    return out, res


def init_params(key, input_nc, gf_dim):
    # Deterministic synthetic init (PyTorch-Conv2d-style uniform bounds).
    def conv_init(k, cin, cout):
        k1, k2 = jax.random.split(k)
        bound = 1.0 / jnp.sqrt(cin * 9.0)
        w = jax.random.uniform(k1, (3, 3, cin, cout), jnp.float32, -bound, bound)
        b = jax.random.uniform(k2, (cout,), jnp.float32, -bound, bound)
        return w, b

    chans = {
        "conv1": [(input_nc, gf_dim), (gf_dim, gf_dim)],
        "conv2": [(gf_dim, 2 * gf_dim), (2 * gf_dim, 2 * gf_dim)],
        "conv3": [(2 * gf_dim, 4 * gf_dim), (4 * gf_dim, 4 * gf_dim),
                  (4 * gf_dim, 4 * gf_dim)],
    }
    params = {}
    for name, specs in chans.items():
        layers = []
        for cin, cout in specs:
            key, sub = jax.random.split(key)
            layers.append(conv_init(sub, cin, cout))
        params[name] = layers
    return params


# --------------------------------------------------------------------------- #
# Pure-JAX reference (for correctness check only)
# --------------------------------------------------------------------------- #
def _reference_forward(x, params):
    def conv(x, w, b):
        y = lax.conv_general_dilated(
            x, w, window_strides=(1, 1), padding="SAME",
            dimension_numbers=("NCHW", "HWIO", "NCHW"))
        return y + b.reshape(1, -1, 1, 1)

    x = x.astype(jnp.float32)
    res = []
    for name in ("conv1", "conv2", "conv3"):
        for w, b in params[name]:
            x = conv(x, w, b)
        res.append(x)
        N, C, H, W = x.shape
        x = x.reshape(N, C, H // 2, 2, W // 2, 2).max(axis=(3, 5))
    return x, res


if __name__ == "__main__":
    key = jax.random.PRNGKey(0)
    key, kx, kp = jax.random.split(key, 3)

    N, C, Hs, Ws = 2, 4, 16, 16      # NCHW input, like the PyTorch module
    gf_dim = 8

    x = jax.random.normal(kx, (N, C, Hs, Ws), jnp.float32)
    params = init_params(kp, C, gf_dim)

    _roll_sign()                      # resolve roll convention before tracing

    fwd = jax.jit(encoder_generator_forward)
    out, res = fwd(x, params)
    out = jax.block_until_ready(out)
    res = [jax.block_until_ready(r) for r in res]

    assert out.shape == (N, 4 * gf_dim, Hs // 8, Ws // 8)
    assert res[0].shape == (N, gf_dim, Hs, Ws)
    assert res[1].shape == (N, 2 * gf_dim, Hs // 2, Ws // 2)
    assert res[2].shape == (N, 4 * gf_dim, Hs // 4, Ws // 4)

    # Numerics vs pure-JAX f32 reference (loose tol: bf16 operands + bf16
    # inter-layer activations, f32 MXU accumulation).
    ref_out, ref_res = _reference_forward(x, params)
    assert jnp.allclose(out, ref_out, rtol=5e-2, atol=5e-2), "final output mismatch"
    for got, want in zip(res, ref_res):
        assert jnp.allclose(got, want, rtol=5e-2, atol=5e-2), "residual mismatch"

    print("KERNEL_OK")
</pallas_src>

<mosaic_0001>
module attributes {stable_mosaic.version = 11 : i64} {
  func.func @probe(%arg0: memref<8x128xf32, #tpu.memory_space<vmem>>, %arg1: memref<8x128xf32, #tpu.memory_space<vmem>>) attributes {dimension_semantics = [], scalar_prefetch = 0 : i64, scratch_operands = 0 : i64, tpu.core_type = #tpu.core_type<tc>} {
    %c0 = arith.constant 0 : index
    %c0_0 = arith.constant 0 : index
    %0 = vector.load %arg0[%c0, %c0_0] : memref<8x128xf32, #tpu.memory_space<vmem>>, vector<8x128xf32>
    %c1_i32 = arith.constant 1 : i32
    %1 = tpu.dynamic_rotate %0 by %c1_i32 dim 1 : vector<8x128xf32>, i32 -> vector<8x128xf32>
    %c0_1 = arith.constant 0 : index
    %c0_2 = arith.constant 0 : index
    %2 = vector.load %arg1[%c0_1, %c0_2] : memref<8x128xf32, #tpu.memory_space<vmem>>, vector<8x128xf32>
    tpu.vector_store %arg1[%c0_1, %c0_2], %1 {strides = array<i32>} : memref<8x128xf32, #tpu.memory_space<vmem>>, vector<8x128xf32>,
    return
  }
}

</mosaic_0001>

<llo_original>
// kernel: tpu_custom_call.1
$region0: #{tpu_custom_call.1}
  #allocation0 [shape = 'u32[]', space=smem, size = 0x4, offset = 0x4, fixed_abs, tag = 'smem constant byte address 0x4 - core index']
  #allocation1 [shape = 'u32[72,128]{1,0:T(1,128)}', space=vmem, size = 0x9000, scoped, tag = 'internal scratch']
  %s0 = inlined_call_operand.hbm [shape: f32[8,128], index: 0, kind: input, shape index: {}]
  %s1 = inlined_call_operand.hbm [shape: f32[8,128], index: 1, kind: output, shape index: {}]
  %s2 = sld [smem:[#allocation0]]
  $region18: #{tpu_custom_call.1} parent=0
    _
  %s4 = ssub.s32 1, %s2
  %s5 = scalar_select 0, %s4, %s2
  $region1: #{tpu_custom_call.1} parent=0
    #allocation2 [shape = 'u8[4096]{0}', space=vmem, size = 0x1000, scoped, tag = 'input window, operand 0, single buffered']
    #allocation3 [shape = 's32[1]{0}', space=sflag, size = 0x4, scoped, tag = 'scoped memory for tpu_custom_call.1']
    #allocation4 [shape = 's32[1]{0}', space=sflag, size = 0x4, scoped, tag = 'scoped memory for tpu_custom_call.1']
    #allocation5 [shape = 'u8[4096]{0}', space=vmem, size = 0x1000, scoped, tag = 'output window, operand 0, single buffered']
    %6 = vsyncpa [#allocation3], 0
    %7 = vsyncpa [#allocation4], 0
    // Predicated region
    $region2: #{tpu_custom_call.1} parent=1 // pred_check
      _
    $region3: #{tpu_custom_call.1} parent=1 // pred_check_branch
      %9 = sbr.rel (0) target = $region5
    $region4: #{tpu_custom_call.1} parent=1 // pred_region
      %11 = vsyncadd [#allocation3], 0
      %s13 = sshll.u32 %s0, 4
      %s14 = int_to_ptr.hbm [resolvable:$true] %s13
      %s15 = sshll.u32 [#allocation2], 4
      %s16 = int_to_ptr.vmem [resolvable:$true] %s15
      %18 = dma.hbm_to_vmem [thread:$0]  %s14, 128, %s16, [#allocation3]
    $region5: #{tpu_custom_call.1} parent=1 // pred_fallthru
      _
    // Predicated region
    $region6: #{tpu_custom_call.1} parent=1 // pred_check
      _
    $region7: #{tpu_custom_call.1} parent=1 // pred_check_branch
      %20 = sbr.rel (0) target = $region9
    $region8: #{tpu_custom_call.1} parent=1 // pred_region
      %22 = dma.done [#allocation3], 128
    $region9: #{tpu_custom_call.1} parent=1 // pred_fallthru
      _
    %v23 = vld [vmem:[#allocation2] sm:$0xff]
    %24 = vrot.lane.b32.xlu0 %v23, 1
    %v25 = vpop.permute.xlu0 %24
    %26 = vst [vmem:[#allocation5] sm:$0xff] %v25
    // Predicated region
    $region10: #{tpu_custom_call.1} parent=1 // pred_check
      _
    $region11: #{tpu_custom_call.1} parent=1 // pred_check_branch
      %28 = sbr.rel (0) target = $region13
    $region12: #{tpu_custom_call.1} parent=1 // pred_region
      %30 = vsyncadd [#allocation4], 0
      %s32 = sshll.u32 [#allocation5], 4
      %s33 = int_to_ptr.vmem [resolvable:$true] %s32
      %s34 = sshll.u32 %s1, 4
      %s35 = int_to_ptr.hbm [resolvable:$true] %s34
      %37 = dma.vmem_to_hbm [thread:$0]  %s33, 128, %s35, [#allocation4]
    $region13: #{tpu_custom_call.1} parent=1 // pred_fallthru
      _
    // Predicated region
    $region14: #{tpu_custom_call.1} parent=1 // pred_check
      _
    $region15: #{tpu_custom_call.1} parent=1 // pred_check_branch
      %39 = sbr.rel (0) target = $region17
    $region16: #{tpu_custom_call.1} parent=1 // pred_region
      %41 = dma.done [#allocation4], 128
    $region17: #{tpu_custom_call.1} parent=1 // pred_fallthru
      _
    %42 = vsyncpa [#allocation3], 1
    %43 = vsyncpa [#allocation4], 1

</llo_original>
